<compile_context>
chip_gen: v6e
topology: v6e:2x2x1
jax: 0.10.0
libtpu: 0.0.40
codegen_flags: <defaults>
</compile_context>

<pallas_src>
from typing import NamedTuple

import jax
import jax.numpy as jnp
from jax.experimental import pallas as pl
from jax.experimental.pallas import tpu as pltpu


# ----------------------------- helpers --------------------------------------


def _round_up(x, m):
    return ((x + m - 1) // m) * m


def _cdiv(a, b):
    return -(-a // b)


def _divisors_desc(dim, unit):
    """All multiples of `unit` that divide `dim`, descending. `dim % unit == 0`."""
    q = dim // unit
    return [d * unit for d in range(q, 0, -1) if q % d == 0]


def _sublane_multiple(dtype):
    """Sublane-packing multiple for a dtype: f32->8, bf16->16, 8-bit->32."""
    return max(8, 32 // jnp.dtype(dtype).itemsize)


def _vmem_budget():
    """Generation-aware VMEM budget (bytes) with headroom."""
    cap = None
    try:
        info = pltpu.get_tpu_info()
        cap = getattr(info, "vmem_capacity_bytes", None)
    except Exception:
        cap = None
    if not cap or cap <= 0:
        cap = 64 << 20  # conservative (v7x per-TC) fallback
    return int(cap) * 3 // 4  # leave 25% headroom for Mosaic internals


# --------------------------- parameter prep ---------------------------------


class PreparedLinearExtended(NamedTuple):
    """BN-folded, cast and 128-padded parameters (prepare once, reuse per call)."""
    w: jax.Array       # (ins_pad, outs_pad), compute dtype, BN scale folded in
    shift: jax.Array   # (1, outs_pad), float32: (b - mean)*scale + beta
    ins: int
    outs: int


def prepare_linear_extended(w_t, b, gamma, beta, running_mean, running_var,
                            eps=1e-5, compute_dtype=jnp.bfloat16):
    """One-time constant fold (eval mode): BN affine + linear bias.

    relu(BN(x @ w_t + b)) == relu(x @ (w_t * scale) + shift)
    """
    ins, outs = w_t.shape
    scale = gamma * jax.lax.rsqrt(running_var + eps)          # (outs,)
    w_scaled = w_t * scale[None, :]                           # (ins, outs), f32
    shift = (b - running_mean) * scale + beta                 # (outs,)

    ins_pad = _round_up(ins, 128)
    outs_pad = _round_up(outs, 128)

    w_p = w_scaled.astype(compute_dtype)
    if (ins_pad, outs_pad) != (ins, outs):
        w_p = jnp.pad(w_p, ((0, ins_pad - ins), (0, outs_pad - outs)))
    shift_p = shift.reshape(1, outs).astype(jnp.float32)
    if outs_pad != outs:
        shift_p = jnp.pad(shift_p, ((0, 0), (0, outs_pad - outs)))
    return PreparedLinearExtended(w=w_p, shift=shift_p, ins=ins, outs=outs)


# ------------------------------ kernels -------------------------------------


def _linear_extended_kernel_2d(x_ref, w_ref, shift_ref, o_ref):
    # Full-K in one MXU pass; f32 accumulation; fused bias/BN shift + ReLU.
    acc = jnp.dot(x_ref[...], w_ref[...], preferred_element_type=jnp.float32)
    o_ref[...] = jnp.maximum(acc + shift_ref[...], 0.0).astype(o_ref.dtype)


def _linear_extended_kernel_3d(x_ref, w_ref, shift_ref, o_ref, acc_ref):
    k = pl.program_id(2)

    @pl.when(k == 0)
    def _():
        acc_ref[...] = jnp.zeros_like(acc_ref)

    acc_ref[...] += jnp.dot(x_ref[...], w_ref[...],
                            preferred_element_type=jnp.float32)

    @pl.when(k == pl.num_programs(2) - 1)
    def _():
        y = acc_ref[...] + shift_ref[...]
        # Dropout (eval mode) == identity; ReLU epilogue.
        o_ref[...] = jnp.maximum(y, 0.0).astype(o_ref.dtype)


# ------------------------------ wrapper -------------------------------------


def linear_extended_fused(x, params: PreparedLinearExtended, *,
                          tm_target=512, tn_target=512, out_dtype=None,
                          vmem_budget_bytes=None):
    """x: (N, ins).  Returns relu(BN(x @ W^T + b)) of shape (N, outs)."""
    N, ins = x.shape
    assert ins == params.ins, (ins, params.ins)
    ins_pad, outs_pad = params.w.shape
    outs = params.outs

    compute_dtype = params.w.dtype
    out_dtype = out_dtype or x.dtype
    in_bytes = jnp.dtype(compute_dtype).itemsize
    out_bytes = jnp.dtype(out_dtype).itemsize
    sub_m = _sublane_multiple(compute_dtype)

    budget = int(vmem_budget_bytes) if vmem_budget_bytes else _vmem_budget()

    def need_bytes(tm_, tn_, tk_, two_d):
        need = (2 * tm_ * tk_ * in_bytes      # x tiles (double buffered)
                + 2 * tk_ * tn_ * in_bytes    # weight tiles (double buffered)
                + 2 * tn_ * 4                 # shift tiles
                + 2 * tm_ * tn_ * out_bytes)  # output tiles (double buffered)
        if not two_d:
            need += tm_ * tn_ * 4             # f32 accumulator scratch
        return need

    # --- tile selection ------------------------------------------------------
    n_sub = _round_up(N, sub_m)
    tn_divs = _divisors_desc(outs_pad, 128)
    tk_divs = _divisors_desc(ins_pad, 128)
    tn_cands = [d for d in tn_divs if d <= max(tn_target, 128)]  # always has 128

    num_m = max(1, _cdiv(n_sub, tm_target))
    chosen = None
    while chosen is None:
        tm_cur = _round_up(_cdiv(n_sub, num_m), sub_m)
        # Prefer a full-K 2-D grid (no accumulator, no K pipeline overhead).
        for tn_cur in tn_cands:
            if need_bytes(tm_cur, tn_cur, ins_pad, True) <= budget:
                chosen = (tm_cur, tn_cur, ins_pad, True)
                break
        # Otherwise fall back to a K-tiled 3-D grid with an f32 accumulator.
        if chosen is None:
            for tn_cur in tn_cands:
                for tk_cur in tk_divs:
                    if tk_cur == ins_pad:
                        continue
                    if need_bytes(tm_cur, tn_cur, tk_cur, False) <= budget:
                        chosen = (tm_cur, tn_cur, tk_cur, False)
                        break
                if chosen is not None:
                    break
        if chosen is None:
            if tm_cur <= sub_m:
                # Minimal tiles no matter what; let vmem_limit cover it.
                chosen = (tm_cur, 128, 128, ins_pad == 128)
            else:
                num_m *= 2  # shrink the M tile and retry

    tm, tn, tk, two_d = chosen
    num_n = outs_pad // tn
    num_k = ins_pad // tk

    # v7x has 2 TensorCores sharded over the "parallel" axes: make sure at least
    # one parallel axis has >= 2 tiles when the problem allows it.
    if num_m == 1 and num_n == 1:
        smaller_tns = [d for d in tn_divs if d < outs_pad]
        if smaller_tns:
            tn = smaller_tns[0]
            num_n = outs_pad // tn
        elif n_sub > sub_m:
            num_m = 2
            tm = _round_up(_cdiv(n_sub, 2), sub_m)
    n_pad = tm * num_m

    # --- minimal per-call padding of x (ins to 128-mult, rows to tile mult) ---
    x_p = x.astype(compute_dtype)
    pad_rows = n_pad - N
    pad_cols = ins_pad - ins
    if pad_rows or pad_cols:
        x_p = jnp.pad(x_p, ((0, pad_rows), (0, pad_cols)))

    need = need_bytes(tm, tn, tk, two_d)
    vmem_limit = int(min(max(need + (8 << 20), 32 << 20),
                         max(budget, need + (4 << 20))))

    cost = pl.CostEstimate(
        flops=int(2 * N * ins * outs),
        transcendentals=0,
        bytes_accessed=int(N * ins * in_bytes + ins_pad * outs_pad * in_bytes
                           + outs_pad * 4 + N * outs * out_bytes),
    )

    if two_d:
        grid = (num_m, num_n)
        grid_spec = pltpu.PrefetchScalarGridSpec(
            num_scalar_prefetch=0,
            grid=grid,
            in_specs=[
                pl.BlockSpec((tm, tk), lambda i, j: (i, 0)),   # x tile (full K)
                pl.BlockSpec((tk, tn), lambda i, j: (0, j)),   # weight tile
                pl.BlockSpec((1, tn), lambda i, j: (0, j)),    # fused shift
            ],
            out_specs=pl.BlockSpec((tm, tn), lambda i, j: (i, j)),
        )
        kernel = _linear_extended_kernel_2d
        dims = ("parallel", "parallel")
    else:
        grid = (num_m, num_n, num_k)
        grid_spec = pltpu.PrefetchScalarGridSpec(
            num_scalar_prefetch=0,
            grid=grid,
            in_specs=[
                pl.BlockSpec((tm, tk), lambda i, j, k: (i, k)),   # x tile
                pl.BlockSpec((tk, tn), lambda i, j, k: (k, j)),   # weight tile
                pl.BlockSpec((1, tn), lambda i, j, k: (0, j)),    # fused shift
            ],
            out_specs=pl.BlockSpec((tm, tn), lambda i, j, k: (i, j)),
            scratch_shapes=[pltpu.VMEM((tm, tn), jnp.float32)],
        )
        kernel = _linear_extended_kernel_3d
        dims = ("parallel", "parallel", "arbitrary")

    out = pl.pallas_call(
        kernel,
        out_shape=jax.ShapeDtypeStruct((n_pad, outs_pad), out_dtype),
        grid_spec=grid_spec,
        compiler_params=pltpu.CompilerParams(
            dimension_semantics=dims,
            vmem_limit_bytes=vmem_limit,
        ),
        cost_estimate=cost,
    )(x_p, params.w, params.shift)

    return out[:N, :outs]


def linear_extended(x, w_t, b, gamma, beta, running_mean, running_var,
                    eps=1e-5, compute_dtype=jnp.bfloat16, **kw):
    """Convenience wrapper. For repeated forwards, call prepare_linear_extended
    once and reuse the result with linear_extended_fused."""
    params = prepare_linear_extended(w_t, b, gamma, beta, running_mean,
                                     running_var, eps=eps,
                                     compute_dtype=compute_dtype)
    return linear_extended_fused(x, params, **kw)


# ------------------------------ reference -----------------------------------


def reference(x, w_t, b, gamma, beta, mean, var, eps=1e-5):
    y = x @ w_t + b
    y = (y - mean) / jnp.sqrt(var + eps) * gamma + beta
    return jnp.maximum(y, 0.0)


def _make_params(key, ins, outs):
    k_w, k_b, k_g, k_be, k_m, k_v = jax.random.split(key, 6)
    # nn.Linear(ins, outs): weight (outs, ins), bias (outs,) -> pass transposed.
    w = jax.random.normal(k_w, (outs, ins), dtype=jnp.float32) / jnp.sqrt(ins)
    w_t = jnp.transpose(w)                                        # (ins, outs)
    b = 0.1 * jax.random.normal(k_b, (outs,), dtype=jnp.float32)
    gamma = 1.0 + 0.1 * jax.random.normal(k_g, (outs,), dtype=jnp.float32)
    beta = 0.1 * jax.random.normal(k_be, (outs,), dtype=jnp.float32)
    mean = 0.2 * jax.random.normal(k_m, (outs,), dtype=jnp.float32)
    var = 1.0 + 0.5 * jax.random.uniform(k_v, (outs,), dtype=jnp.float32)
    return w_t, b, gamma, beta, mean, var


if __name__ == "__main__":
    key = jax.random.PRNGKey(0)
    k1, k2, k3, k4 = jax.random.split(key, 4)

    # --- Test 1: small batch, default bf16 compute, full-K 2-D grid ---------
    N, ins, outs = 16, 32, 64
    x = jax.random.normal(k1, (N, ins), dtype=jnp.float32)
    w_t, b, gamma, beta, mean, var = _make_params(k2, ins, outs)

    out = linear_extended(x, w_t, b, gamma, beta, mean, var)   # bf16 compute
    out = jax.block_until_ready(out)
    ref = reference(x, w_t, b, gamma, beta, mean, var)
    assert out.shape == (N, outs)
    assert jnp.allclose(out, ref, atol=5e-2, rtol=5e-2)

    # --- Test 2: f32 compute opt-in, multi-tile parallel grid ----------------
    N2, ins2, outs2 = 128, 384, 256
    x2 = jax.random.normal(k3, (N2, ins2), dtype=jnp.float32)
    w_t2, b2, gamma2, beta2, mean2, var2 = _make_params(k4, ins2, outs2)

    params_f32 = prepare_linear_extended(w_t2, b2, gamma2, beta2, mean2, var2,
                                         compute_dtype=jnp.float32)
    out2 = linear_extended_fused(x2, params_f32, out_dtype=jnp.float32)
    out2 = jax.block_until_ready(out2)
    ref2 = reference(x2, w_t2, b2, gamma2, beta2, mean2, var2)
    assert out2.shape == (N2, outs2)
    assert jnp.allclose(out2, ref2, atol=2e-3, rtol=2e-3)

    # --- Test 3: force the 3-D K-tiled accumulator path (tiny VMEM budget) ---
    params_bf16 = prepare_linear_extended(w_t2, b2, gamma2, beta2, mean2, var2,
                                          compute_dtype=jnp.bfloat16)
    out3 = linear_extended_fused(x2, params_bf16, out_dtype=jnp.float32,
                                 vmem_budget_bytes=400 * 1024)
    out3 = jax.block_until_ready(out3)
    assert out3.shape == (N2, outs2)
    assert jnp.allclose(out3, ref2, atol=5e-2, rtol=5e-2)

    print("KERNEL_OK")
</pallas_src>

<mosaic_0001>
module attributes {stable_mosaic.version = 11 : i64} {
  func.func @_linear_extended_kernel_2d(%arg0: i32, %arg1: i32, %arg2: memref<16x128xbf16, #tpu.memory_space<vmem>>, %arg3: memref<128x128xbf16, #tpu.memory_space<vmem>>, %arg4: memref<1x128xf32, #tpu.memory_space<vmem>>, %arg5: memref<16x128xf32, #tpu.memory_space<vmem>>) attributes {dimension_semantics = [#tpu.dimension_semantics<parallel>, #tpu.dimension_semantics<parallel>], iteration_bounds = array<i64: 1, 1>, scalar_prefetch = 0 : i64, scratch_operands = 0 : i64, tpu.core_type = #tpu.core_type<tc>, window_params = [{transform_indices = @transform_0, window_bounds = array<i64: 16, 128>}, {transform_indices = @transform_1, window_bounds = array<i64: 128, 128>}, {transform_indices = @transform_2, window_bounds = array<i64: 1, 128>}, {transform_indices = @transform_3, window_bounds = array<i64: 16, 128>}]} {
    %c0 = arith.constant 0 : index
    %c0_0 = arith.constant 0 : index
    %0 = vector.load %arg2[%c0, %c0_0] : memref<16x128xbf16, #tpu.memory_space<vmem>>, vector<16x128xbf16>
    %c0_1 = arith.constant 0 : index
    %c0_2 = arith.constant 0 : index
    %1 = vector.load %arg3[%c0_1, %c0_2] : memref<128x128xbf16, #tpu.memory_space<vmem>>, vector<128x128xbf16>
    %cst = arith.constant dense<0.000000e+00> : vector<16x128xf32>
    %2 = tpu.matmul %0, %1, %cst {dimension_numbers = #tpu.dot_dimension_numbers<[1], [0], [0], [1], [0, 0, 1, 1], [], []>} : vector<16x128xbf16>, vector<128x128xbf16>, vector<16x128xf32> -> vector<16x128xf32>
    %c0_3 = arith.constant 0 : index
    %c0_4 = arith.constant 0 : index
    %3 = vector.load %arg4[%c0_3, %c0_4] : memref<1x128xf32, #tpu.memory_space<vmem>>, vector<1x128xf32>
    %4 = vector.broadcast %3 : vector<1x128xf32> to vector<16x128xf32>
    %5 = arith.addf %2, %4 : vector<16x128xf32>
    %cst_5 = arith.constant 0.000000e+00 : f32
    %6 = vector.broadcast %cst_5 : f32 to vector<16x128xf32>
    %7 = arith.maximumf %5, %6 : vector<16x128xf32>
    %c0_6 = arith.constant 0 : index
    %c0_7 = arith.constant 0 : index
    %8 = vector.load %arg5[%c0_6, %c0_7] : memref<16x128xf32, #tpu.memory_space<vmem>>, vector<16x128xf32>
    tpu.vector_store %arg5[%c0_6, %c0_7], %7 {strides = array<i32>} : memref<16x128xf32, #tpu.memory_space<vmem>>, vector<16x128xf32>,
    return
  }
  func.func @transform_0(%arg0: i32, %arg1: i32) -> (i32, i32) {
    %c0_i32 = arith.constant 0 : i32
    %c0_i32_0 = arith.constant 0 : i32
    return %arg0, %c0_i32 : i32, i32
  }
  func.func @transform_1(%arg0: i32, %arg1: i32) -> (i32, i32) {
    %c0_i32 = arith.constant 0 : i32
    %c0_i32_0 = arith.constant 0 : i32
    return %c0_i32, %arg1 : i32, i32
  }
  func.func @transform_2(%arg0: i32, %arg1: i32) -> (i32, i32) {
    %c0_i32 = arith.constant 0 : i32
    %c0_i32_0 = arith.constant 0 : i32
    return %c0_i32, %arg1 : i32, i32
  }
  func.func @transform_3(%arg0: i32, %arg1: i32) -> (i32, i32) {
    %c0_i32 = arith.constant 0 : i32
    return %arg0, %arg1 : i32, i32
  }
}

</mosaic_0001>

<llo_original>
// kernel: tpu_custom_call.1
$region0: #{tpu_custom_call.1}
  #allocation0 [shape = 'u32[]', space=smem, size = 0x4, offset = 0x4, fixed_abs, tag = 'smem constant byte address 0x4 - core index']
  #allocation1 [shape = 'u32[144,128]{1,0:T(1,128)}', space=vmem, size = 0x12000, scoped, tag = 'internal scratch']
  %s0 = inlined_call_operand.hbm [shape: bf16[16,128], index: 0, kind: input, shape index: {}]
  %s1 = inlined_call_operand.hbm [shape: bf16[128,128], index: 1, kind: input, shape index: {}]
  %s2 = inlined_call_operand.vmem [shape: f32[1,128], index: 2, kind: input, shape index: {}]
  %s3 = inlined_call_operand.hbm [shape: f32[16,128], index: 3, kind: output, shape index: {}]
  %s4 = sld [smem:[#allocation0]]
  $region30: #{tpu_custom_call.1} parent=0
    _
  %s6 = ssub.s32 1, %s4
  %s7 = scalar_select 0, %s6, %s4
  $region1: #{tpu_custom_call.1} parent=0
    #allocation2 [shape = 'u8[4096]{0}', space=vmem, size = 0x1000, scoped, tag = 'input window, operand 0, single buffered']
    #allocation3 [shape = 's32[1]{0}', space=sflag, size = 0x4, scoped, tag = 'scoped memory for tpu_custom_call.1']
    #allocation4 [shape = 's32[1]{0}', space=sflag, size = 0x4, scoped, tag = 'scoped memory for tpu_custom_call.1']
    #allocation5 [shape = 'u8[32768]{0}', space=vmem, size = 0x8000, scoped, tag = 'input window, operand 1, single buffered']
    #allocation6 [shape = 's32[1]{0}', space=sflag, size = 0x4, scoped, tag = 'scoped memory for tpu_custom_call.1']
    #allocation7 [shape = 'u8[8192]{0}', space=vmem, size = 0x2000, scoped, tag = 'output window, operand 0, single buffered']
    %8 = vsyncpa [#allocation3], 0
    %9 = vsyncpa [#allocation6], 0
    %10 = vsyncpa [#allocation4], 0
    // Predicated region
    $region2: #{tpu_custom_call.1} parent=1 // pred_check
      _
    $region3: #{tpu_custom_call.1} parent=1 // pred_check_branch
      %12 = sbr.rel (0) target = $region5
    $region4: #{tpu_custom_call.1} parent=1 // pred_region
      %s14 = ssub.s32 128, 128
      %15 = vsyncadd [#allocation3], %s14
      %s16 = sshll.u32 [#allocation2], 4
      %s17 = int_to_ptr.vmem [resolvable:$true] %s16
      %22 = dma.hbm_to_vmem [thread:$0]  %s0, 128, %s17, [#allocation3], 64, 64, 4
    $region5: #{tpu_custom_call.1} parent=1 // pred_fallthru
      _
    // Predicated region
    $region6: #{tpu_custom_call.1} parent=1 // pred_check
      _
    $region7: #{tpu_custom_call.1} parent=1 // pred_check_branch
      %24 = sbr.rel (0) target = $region9
    $region8: #{tpu_custom_call.1} parent=1 // pred_region
      %s26 = ssub.s32 1024, 1024
      %27 = vsyncadd [#allocation6], %s26
      %s28 = sshll.u32 [#allocation5], 4
      %s29 = int_to_ptr.vmem [resolvable:$true] %s28
      %34 = dma.hbm_to_vmem [thread:$0]  %s1, 1024, %s29, [#allocation6], 64, 64, 4
    $region9: #{tpu_custom_call.1} parent=1 // pred_fallthru
      _
    // Predicated region
    $region10: #{tpu_custom_call.1} parent=1 // pred_check
      _
    $region11: #{tpu_custom_call.1} parent=1 // pred_check_branch
      %36 = sbr.rel (0) target = $region13
    $region12: #{tpu_custom_call.1} parent=1 // pred_region
      _
    $region13: #{tpu_custom_call.1} parent=1 // pred_fallthru
      _
    // Predicated region
    $region14: #{tpu_custom_call.1} parent=1 // pred_check
      _
    $region15: #{tpu_custom_call.1} parent=1 // pred_check_branch
      %38 = sbr.rel (0) target = $region17
    $region16: #{tpu_custom_call.1} parent=1 // pred_region
      %39 = dma.done [#allocation3], 128
    $region17: #{tpu_custom_call.1} parent=1 // pred_fallthru
      _
    // Predicated region
    $region18: #{tpu_custom_call.1} parent=1 // pred_check
      _
    $region19: #{tpu_custom_call.1} parent=1 // pred_check_branch
      %41 = sbr.rel (0) target = $region21
    $region20: #{tpu_custom_call.1} parent=1 // pred_region
      %42 = dma.done [#allocation6], 1024
    $region21: #{tpu_custom_call.1} parent=1 // pred_fallthru
      _
    %v44 = vld [vmem:[#allocation2] sm:$0xf]
    %v45 = vld [vmem:[#allocation2 + $0x4] sm:$0xf]
    %v46 = vld [vmem:[#allocation5] sm:$0xf]
    %v47 = vld [vmem:[#allocation5 + $0x4] sm:$0xf]
    %v48 = vld [vmem:[#allocation5 + $0x8] sm:$0xf]
    %v49 = vld [vmem:[#allocation5 + $0xc] sm:$0xf]
    %v50 = vld [vmem:[#allocation5 + $0x10] sm:$0xf]
    %v51 = vld [vmem:[#allocation5 + $0x14] sm:$0xf]
    %v52 = vld [vmem:[#allocation5 + $0x18] sm:$0xf]
    %v53 = vld [vmem:[#allocation5 + $0x1c] sm:$0xf]
    %v54 = vld [vmem:[#allocation5 + $0x20] sm:$0xf]
    %v55 = vld [vmem:[#allocation5 + $0x24] sm:$0xf]
    %v56 = vld [vmem:[#allocation5 + $0x28] sm:$0xf]
    %v57 = vld [vmem:[#allocation5 + $0x2c] sm:$0xf]
    %v58 = vld [vmem:[#allocation5 + $0x30] sm:$0xf]
    %v59 = vld [vmem:[#allocation5 + $0x34] sm:$0xf]
    %v60 = vld [vmem:[#allocation5 + $0x38] sm:$0xf]
    %v61 = vld [vmem:[#allocation5 + $0x3c] sm:$0xf]
    %v62 = vld [vmem:[%s2] sm:$0x1]
    %v64 = vlaneseq
    %v65 = vshrl.u32 %v64, 7
    %v66 = vsub.s32 0, %v65
    %v67 = vrot.slane %v62, %v66
    %v71 = vunpack.c.l.b16 %v44
    %v72 = vunpack.c.l.b16 %v45
    %v73 = vpack.c.b16 %v72, %v71
    %v91 = vunpack.c.l.b16 %v46
    %v92 = vunpack.c.l.b16 %v47
    %v93 = vunpack.c.l.b16 %v48
    %v94 = vunpack.c.l.b16 %v49
    %v95 = vunpack.c.l.b16 %v50
    %v96 = vunpack.c.l.b16 %v51
    %v97 = vunpack.c.l.b16 %v52
    %v98 = vunpack.c.l.b16 %v53
    %v99 = vunpack.c.l.b16 %v54
    %v100 = vunpack.c.l.b16 %v55
    %v101 = vunpack.c.l.b16 %v56
    %v102 = vunpack.c.l.b16 %v57
    %v103 = vunpack.c.l.b16 %v58
    %v104 = vunpack.c.l.b16 %v59
    %v105 = vunpack.c.l.b16 %v60
    %v106 = vunpack.c.l.b16 %v61
    %v107 = vpack.c.b16 %v92, %v91
    %v108 = vpack.c.b16 %v94, %v93
    %v109 = vpack.c.b16 %v96, %v95
    %v110 = vpack.c.b16 %v98, %v97
    %v111 = vpack.c.b16 %v100, %v99
    %v112 = vpack.c.b16 %v102, %v101
    %v113 = vpack.c.b16 %v104, %v103
    %v114 = vpack.c.b16 %v106, %v105
    %123 = vmatprep.subr.bf16.mxu0 0
    %124 = vmatpush1.bf16.msra.mxu0 %v114
    %125 = vmatprep.subr.bf16.mxu0 0
    %126 = vmatpush1.bf16.msra.mxu0 %v113
    %127 = vmatprep.subr.bf16.mxu0 0
    %128 = vmatpush1.bf16.msra.mxu0 %v112
    %129 = vmatprep.subr.bf16.mxu0 0
    %130 = vmatpush1.bf16.msra.mxu0 %v111
    %131 = vmatprep.subr.bf16.mxu0 0
    %132 = vmatpush1.bf16.msra.mxu0 %v110
    %133 = vmatprep.subr.bf16.mxu0 0
    %134 = vmatpush1.bf16.msra.mxu0 %v109
    %135 = vmatprep.subr.bf16.mxu0 0
    %136 = vmatpush1.bf16.msra.mxu0 %v108
    %137 = vmatprep.subr.bf16.mxu0 0
    %138 = vmatpush1.bf16.msra.mxu0 %v107
    %139 = vmatprep.subr.bf16.mxu0 0
    %140 = vmatpush2.bf16.msra.mxu0 0
    %141 = vmatprep.subr.bf16.mxu0 0
    %142 = vmatpush2.bf16.msra.mxu0 0
    %143 = vmatprep.subr.bf16.mxu0 0
    %144 = vmatpush2.bf16.msra.mxu0 0
    %145 = vmatprep.subr.bf16.mxu0 0
    %146 = vmatpush2.bf16.msra.mxu0 0
    %147 = vmatprep.subr.bf16.mxu0 0
    %148 = vmatpush2.bf16.msra.mxu0 0
    %149 = vmatprep.subr.bf16.mxu0 0
    %150 = vmatpush2.bf16.msra.mxu0 0
    %151 = vmatprep.subr.bf16.mxu0 0
    %152 = vmatpush2.bf16.msra.mxu0 0
    %153 = vmatprep.subr.bf16.mxu0 0
    %154 = vmatpush2.bf16.msra.mxu0 0
    %155 = vmatprep.mubr.bf16.mxu0 0
    %156 = vmatmul.mubr.bf16.gmra.mxu0 %v73
    %v157 = vpop.f32.mrf.mxu0
    %v158 = vadd.f32 %v67, %v157
    %v159 = vpop.f32.mrf.mxu0
    %v160 = vpop.f32.mrf.mxu0
    %v161 = vadd.f32 %v67, %v160
    %v162 = vpop.f32.mrf.mxu0
    %163 = vdwg.mxu0
    %v164 = vmax.f32 %v158, 0.0
    %v165 = vmax.f32 %v161, 0.0
    %166 = vst [vmem:[#allocation7] sm:$0xff] %v164
    %167 = vst [vmem:[#allocation7 + $0x8] sm:$0xff] %v165
    // Predicated region
    $region22: #{tpu_custom_call.1} parent=1 // pred_check
      _
    $region23: #{tpu_custom_call.1} parent=1 // pred_check_branch
      %169 = sbr.rel (0) target = $region25
    $region24: #{tpu_custom_call.1} parent=1 // pred_region
      %s171 = ssub.s32 256, 256
      %172 = vsyncadd [#allocation4], %s171
      %s173 = sshll.u32 [#allocation7], 4
      %s174 = int_to_ptr.vmem [resolvable:$true] %s173
      %179 = dma.vmem_to_hbm [thread:$0]  %s174, 256, %s3, [#allocation4], 128, 128, 8
    $region25: #{tpu_custom_call.1} parent=1 // pred_fallthru
      _
    // Predicated region
    $region26: #{tpu_custom_call.1} parent=1 // pred_check
      _
    $region27: #{tpu_custom_call.1} parent=1 // pred_check_branch
      %181 = sbr.rel (0) target = $region29
    $region28: #{tpu_custom_call.1} parent=1 // pred_region
      %182 = dma.done [#allocation4], 256
    $region29: #{tpu_custom_call.1} parent=1 // pred_fallthru
      _
    %183 = vsyncpa [#allocation3], 1
    %184 = vsyncpa [#allocation6], 1
    %185 = vsyncpa [#allocation4], 1

</llo_original>
